<compile_context>
chip_gen: v6e
topology: v6e:2x2x1
jax: 0.10.0
libtpu: 0.0.40
codegen_flags: <defaults>
</compile_context>

<pallas_src>
import functools

import jax
import jax.numpy as jnp
import numpy as np
from jax.experimental import pallas as pl
from jax.experimental.pallas import tpu as pltpu

_LANE = 128
_BLOCK_ROWS = 1024  # (1024,128) f32 block = 512 KiB per stream per buffer.


def _dice_partial_kernel(l_ref, t_ref, o_ref, *, block_rows, bps, total,
                         needs_mask):
    """Accumulates per-lane [intersection, union] partial sums.

    l_ref, t_ref : (block_rows, 128) VMEM tiles in their native dtype.
    o_ref        : (1, 2, 128) f32 VMEM block, resident across the inner
                   (reduction) grid axis; row 0 = intersection, row 1 = union.
    """
    b = pl.program_id(1)

    @pl.when(b == 0)
    def _init():
        o_ref[...] = jnp.zeros_like(o_ref)

    p = jax.nn.sigmoid(l_ref[...].astype(jnp.float32))   # EUP transcendental
    t = t_ref[...].astype(jnp.float32)

    if needs_mask:
        # Mask lane/row padding, the ragged last block, and phantom (clamped)
        # blocks from the shard split.  jnp.where (not multiply) so stale /
        # NaN garbage in the padded region of a partial block cannot leak.
        # int32 flat index is fine for any realistic segmentation map.
        s = pl.program_id(0)
        blk = s * bps + b
        row_ids = jax.lax.broadcasted_iota(jnp.int32, (block_rows, _LANE), 0)
        lane_ids = jax.lax.broadcasted_iota(jnp.int32, (block_rows, _LANE), 1)
        elem = (blk * block_rows + row_ids) * _LANE + lane_ids
        valid = elem < total
        p = jnp.where(valid, p, 0.0)
        t = jnp.where(valid, t, 0.0)

    inter = jnp.sum(p * t, axis=0, keepdims=True)   # (1, 128) sublane reduce
    union = jnp.sum(p + t, axis=0, keepdims=True)   # (1, 128)
    o_ref[:, 0:1, :] += inter.reshape(1, 1, _LANE)
    o_ref[:, 1:2, :] += union.reshape(1, 1, _LANE)


def _prep(x):
    # Keep floating inputs in native dtype (halves HBM bytes for bf16); cast
    # to f32 happens inside the kernel.  Non-float targets cast here.
    if not jnp.issubdtype(x.dtype, jnp.floating):
        x = x.astype(jnp.float32)
    return x.reshape(-1)


@jax.jit
def dice_loss(logits, targets):
    assert logits.shape == targets.shape
    n = targets.shape[0]
    total = int(np.prod(logits.shape))

    lf = _prep(logits)
    tf = _prep(targets)

    rows = -(-total // _LANE)
    pad = rows * _LANE - total
    if pad:
        # Only hit when total is not a multiple of 128; padded values are
        # masked inside the kernel, so zero padding is fine.
        lf = jnp.pad(lf, (0, pad))
        tf = jnp.pad(tf, (0, pad))

    lf = lf.reshape(rows, _LANE)
    tf = tf.reshape(rows, _LANE)

    block_rows = min(_BLOCK_ROWS, rows)     # full-dim block if rows is small
    n_blocks = -(-rows // block_rows)
    n_shards = 2 if n_blocks >= 2 else 1    # megacore split (v7x: 2 TCs)
    bps = -(-n_blocks // n_shards)          # blocks per shard

    # Does shard*block coverage extend past the real data?  (static)
    needs_mask = (n_shards * bps * block_rows * _LANE) != total

    if n_shards * bps > n_blocks:
        # Phantom blocks: clamp the HBM block index (contribution is fully
        # masked in the kernel), keeping every DMA in bounds.
        in_idx = lambda s, b: (jnp.minimum(s * bps + b, n_blocks - 1), 0)
    else:
        in_idx = lambda s, b: (s * bps + b, 0)

    in_spec = pl.BlockSpec((block_rows, _LANE), in_idx)

    kernel = functools.partial(
        _dice_partial_kernel,
        block_rows=block_rows, bps=bps, total=total, needs_mask=needs_mask)

    partials = pl.pallas_call(
        kernel,
        out_shape=jax.ShapeDtypeStruct((n_shards, 2, _LANE), jnp.float32),
        grid=(n_shards, bps),
        in_specs=[in_spec, in_spec],
        out_specs=pl.BlockSpec((1, 2, _LANE), lambda s, b: (s, 0, 0)),
        compiler_params=pltpu.CompilerParams(
            dimension_semantics=("parallel", "arbitrary")),
    )(lf, tf)

    intersection = jnp.sum(partials[:, 0, :])
    union = jnp.sum(partials[:, 1, :])
    eps = jnp.float32(1e-07)
    dice = (2.0 * intersection + eps) / (union + eps)
    return 1.0 - dice / jnp.float32(n)


def _dice_loss_ref(logits, targets):
    n = targets.shape[0]
    preds = jax.nn.sigmoid(logits.astype(jnp.float32))
    pf = preds.reshape(n, -1)
    tf = targets.astype(jnp.float32).reshape(n, -1)
    inter = jnp.sum(pf * tf)
    union = jnp.sum(pf + tf)
    dice = (2.0 * inter + 1e-07) / (union + 1e-07)
    return 1.0 - dice / n


if __name__ == "__main__":
    key = jax.random.PRNGKey(0)
    k_logits, k_targets = jax.random.split(key)

    # NCHW inputs, as the PyTorch module would receive from a segmentation net.
    x_shape = (2, 4, 16, 16)
    logits = jax.random.normal(k_logits, x_shape, dtype=jnp.float32)
    targets = (jax.random.uniform(k_targets, x_shape) > 0.5).astype(jnp.float32)

    out = dice_loss(logits, targets)
    jax.block_until_ready(out)

    ref = _dice_loss_ref(logits, targets)
    np.testing.assert_allclose(np.asarray(out), np.asarray(ref),
                               rtol=1e-5, atol=1e-6)
    print("KERNEL_OK")
</pallas_src>

<mosaic_0001>
module attributes {stable_mosaic.version = 11 : i64} {
  func.func @_dice_partial_kernel(%arg0: i32, %arg1: i32, %arg2: memref<16x128xf32, #tpu.memory_space<vmem>>, %arg3: memref<16x128xf32, #tpu.memory_space<vmem>>, %arg4: memref<1x2x128xf32, #tpu.memory_space<vmem>>) attributes {dimension_semantics = [#tpu.dimension_semantics<parallel>, #tpu.dimension_semantics<arbitrary>], iteration_bounds = array<i64: 1, 1>, scalar_prefetch = 0 : i64, scratch_operands = 0 : i64, tpu.core_type = #tpu.core_type<tc>, window_params = [{transform_indices = @transform_0, window_bounds = array<i64: 16, 128>}, {transform_indices = @transform_1, window_bounds = array<i64: 16, 128>}, {transform_indices = @transform_2, window_bounds = array<i64: 1, 2, 128>}]} {
    %c0_i32 = arith.constant 0 : i32
    %0 = arith.cmpi eq, %arg1, %c0_i32 : i32
    %1 = arith.extui %0 : i1 to i32
    %c0_i32_0 = arith.constant 0 : i32
    %2 = arith.cmpi ne, %1, %c0_i32_0 : i32
    scf.if %2 {
      %cst_17 = arith.constant 0.000000e+00 : f32
      %24 = vector.broadcast %cst_17 : f32 to vector<1x2x128xf32>
      %c0_18 = arith.constant 0 : index
      %c0_19 = arith.constant 0 : index
      %c0_20 = arith.constant 0 : index
      %25 = vector.load %arg4[%c0_18, %c0_19, %c0_20] : memref<1x2x128xf32, #tpu.memory_space<vmem>>, vector<1x2x128xf32>
      tpu.vector_store %arg4[%c0_18, %c0_19, %c0_20], %24 {strides = array<i32>} : memref<1x2x128xf32, #tpu.memory_space<vmem>>, vector<1x2x128xf32>,
    } else {
    }
    %c0 = arith.constant 0 : index
    %c0_1 = arith.constant 0 : index
    %3 = vector.load %arg2[%c0, %c0_1] : memref<16x128xf32, #tpu.memory_space<vmem>>, vector<16x128xf32>
    %4 = arith.negf %3 : vector<16x128xf32>
    %5 = math.exp %4 : vector<16x128xf32>
    %cst = arith.constant 1.000000e+00 : f32
    %6 = vector.broadcast %cst : f32 to vector<16x128xf32>
    %7 = arith.addf %6, %5 : vector<16x128xf32>
    %8 = arith.divf %6, %7 : vector<16x128xf32>
    %c0_2 = arith.constant 0 : index
    %c0_3 = arith.constant 0 : index
    %9 = vector.load %arg3[%c0_2, %c0_3] : memref<16x128xf32, #tpu.memory_space<vmem>>, vector<16x128xf32>
    %10 = arith.mulf %8, %9 : vector<16x128xf32>
    %cst_4 = arith.constant dense<0.000000e+00> : vector<128xf32>
    %11 = vector.multi_reduction <add>, %10, %cst_4 [0] : vector<16x128xf32> to vector<128xf32>
    %12 = vector.shape_cast %11 : vector<128xf32> to vector<1x128xf32>
    %13 = arith.addf %8, %9 : vector<16x128xf32>
    %cst_5 = arith.constant dense<0.000000e+00> : vector<128xf32>
    %14 = vector.multi_reduction <add>, %13, %cst_5 [0] : vector<16x128xf32> to vector<128xf32>
    %15 = vector.shape_cast %14 : vector<128xf32> to vector<1x128xf32>
    %c0_6 = arith.constant 0 : index
    %c0_7 = arith.constant 0 : index
    %c0_8 = arith.constant 0 : index
    %16 = vector.load %arg4[%c0_6, %c0_7, %c0_8] : memref<1x2x128xf32, #tpu.memory_space<vmem>>, vector<1x1x128xf32>
    %17 = vector.shape_cast %12 : vector<1x128xf32> to vector<1x1x128xf32>
    %18 = arith.addf %16, %17 : vector<1x1x128xf32>
    %c0_9 = arith.constant 0 : index
    %c0_10 = arith.constant 0 : index
    %c0_11 = arith.constant 0 : index
    %19 = vector.load %arg4[%c0_9, %c0_10, %c0_11] : memref<1x2x128xf32, #tpu.memory_space<vmem>>, vector<1x1x128xf32>
    tpu.vector_store %arg4[%c0_9, %c0_10, %c0_11], %18 {strides = array<i32>} : memref<1x2x128xf32, #tpu.memory_space<vmem>>, vector<1x1x128xf32>,
    %c0_12 = arith.constant 0 : index
    %c1 = arith.constant 1 : index
    %c0_13 = arith.constant 0 : index
    %20 = vector.load %arg4[%c0_12, %c1, %c0_13] : memref<1x2x128xf32, #tpu.memory_space<vmem>>, vector<1x1x128xf32>
    %21 = vector.shape_cast %15 : vector<1x128xf32> to vector<1x1x128xf32>
    %22 = arith.addf %20, %21 : vector<1x1x128xf32>
    %c0_14 = arith.constant 0 : index
    %c1_15 = arith.constant 1 : index
    %c0_16 = arith.constant 0 : index
    %23 = vector.load %arg4[%c0_14, %c1_15, %c0_16] : memref<1x2x128xf32, #tpu.memory_space<vmem>>, vector<1x1x128xf32>
    tpu.vector_store %arg4[%c0_14, %c1_15, %c0_16], %22 {strides = array<i32>} : memref<1x2x128xf32, #tpu.memory_space<vmem>>, vector<1x1x128xf32>,
    return
  }
  func.func @transform_0(%arg0: i32, %arg1: i32) -> (i32, i32) {
    %c1_i32 = arith.constant 1 : i32
    %0 = arith.muli %arg0, %c1_i32 : i32
    %1 = arith.addi %0, %arg1 : i32
    %c0_i32 = arith.constant 0 : i32
    %c0_i32_0 = arith.constant 0 : i32
    return %1, %c0_i32 : i32, i32
  }
  func.func @transform_1(%arg0: i32, %arg1: i32) -> (i32, i32) {
    %c1_i32 = arith.constant 1 : i32
    %0 = arith.muli %arg0, %c1_i32 : i32
    %1 = arith.addi %0, %arg1 : i32
    %c0_i32 = arith.constant 0 : i32
    %c0_i32_0 = arith.constant 0 : i32
    return %1, %c0_i32 : i32, i32
  }
  func.func @transform_2(%arg0: i32, %arg1: i32) -> (i32, i32, i32) {
    %c0_i32 = arith.constant 0 : i32
    %c0_i32_0 = arith.constant 0 : i32
    %c0_i32_1 = arith.constant 0 : i32
    return %arg0, %c0_i32, %c0_i32_0 : i32, i32, i32
  }
}

</mosaic_0001>

<llo_original>
// kernel: dice_loss.1
$region0: #{dice_loss.1}
  #allocation0 [shape = 'u32[]', space=smem, size = 0x4, offset = 0x4, fixed_abs, tag = 'smem constant byte address 0x4 - core index']
  #allocation1 [shape = 'u32[144,128]{1,0:T(1,128)}', space=vmem, size = 0x12000, scoped, tag = 'internal scratch']
  %s0 = inlined_call_operand.vmem [shape: f32[16,128], index: 0, kind: input, shape index: {}]
  %s1 = inlined_call_operand.vmem [shape: f32[16,128], index: 1, kind: input, shape index: {}]
  %s2 = inlined_call_operand.vmem [shape: f32[1,2,128], index: 2, kind: output, shape index: {}]
  %s3 = sld [smem:[#allocation0]]
  $region22: #{dice_loss.1} parent=0
    _
  %s5 = ssub.s32 1, %s3
  %s6 = scalar_select 0, %s5, %s3
  // Predicated region
  $region2: #{dice_loss.1} parent=0 // pred_check
    _
  $region3: #{dice_loss.1} parent=0 // pred_check_branch
    %8 = sbr.rel (0) target = $region5
  $region4: #{dice_loss.1} parent=0 // pred_region
    %s9 = sadd.s32 0, 0
    %s10 = smul.u32 2, %s9
    %p11 = scmp.lt.s32.totalorder %s10, 1
    %s12 = scalar_select %p11, %s10, 1
    %s13 = smul.addr %s12, 8
    %s14 = scalar_lea.vmem %s0, %s13
    %s15 = sadd.s32 0, 0
    %s16 = smul.u32 2, %s15
  $region5: #{dice_loss.1} parent=0 // pred_fallthru
    _
  // Predicated region
  $region6: #{dice_loss.1} parent=0 // pred_check
    _
  $region7: #{dice_loss.1} parent=0 // pred_check_branch
    %18 = sbr.rel (0) target = $region9
  $region8: #{dice_loss.1} parent=0 // pred_region
    %s19 = sadd.s32 0, 0
    %s20 = smul.u32 2, %s19
    %p21 = scmp.lt.s32.totalorder %s20, 1
    %s22 = scalar_select %p21, %s20, 1
    %s23 = smul.addr %s22, 8
    %s24 = scalar_lea.vmem %s1, %s23
    %s25 = sadd.s32 0, 0
    %s26 = smul.u32 2, %s25
  $region9: #{dice_loss.1} parent=0 // pred_fallthru
    _
  %s27 = sadd.s32 0, 0
  %s28 = smul.u32 2, %s27
  %p29 = scmp.lt.s32.totalorder %s28, 1
  %s30 = scalar_select %p29, %s28, 1
  %s31 = smul.addr %s30, 8
  %s32 = scalar_lea.vmem %s0, %s31
  %s33 = sadd.s32 0, 0
  %s34 = smul.u32 2, %s33
  %p35 = scmp.lt.s32.totalorder %s34, 1
  %s36 = scalar_select %p35, %s34, 1
  %s37 = smul.addr %s36, 8
  %s38 = scalar_lea.vmem %s1, %s37
  %s39 = sadd.s32 0, 0
  %s40 = smul.u32 2, %s39
  %p41 = scmp.lt.s32.totalorder %s40, 1
  %s42 = scalar_select %p41, %s40, 1
  %s43 = smul.addr %s42, 8
  %s44 = scalar_lea.vmem %s0, %s43
  %s45 = sadd.s32 0, 0
  %s46 = smul.u32 2, %s45
  %s47 = sadd.s32 0, 0
  %s48 = smul.u32 2, %s47
  %p49 = scmp.lt.s32.totalorder %s48, 1
  %s50 = scalar_select %p49, %s48, 1
  %s51 = smul.addr %s50, 8
  %s52 = scalar_lea.vmem %s1, %s51
  %s53 = sadd.s32 0, 0
  %s54 = smul.u32 2, %s53
  %p55 = scmp.eq.s32.totalorder 0, 0
  // Predicated region
  $region10: #{dice_loss.1} parent=0 // pred_check
    %p56 = pneg %p55
  $region11: #{dice_loss.1} parent=0 // pred_check_branch
    %58 = sbr.rel (%p56) target = $region13
  $region12: #{dice_loss.1} parent=0 // pred_region
    %59 = vst [vmem:[%s2] sm:$0x3] 0.0
  $region13: #{dice_loss.1} parent=0 // pred_fallthru
    _
  %v60 = vld [vmem:[%s44] sm:$0xff]
  %v61 = vld [vmem:[%s44 + $0x8] sm:$0xff]
  %v62 = vxor.u32 %v60, 2147483648
  %v63 = vxor.u32 %v61, 2147483648
  %v64 = vmul.f32 %v62, 1.442695
  %v65 = vpow.pop %v64
  %v66 = vmul.f32 %v63, 1.442695
  %v67 = vpow.pop %v66
  %v68 = vadd.f32 %v65, 1.0
  %v69 = vadd.f32 %v67, 1.0
  %v70 = vrcp.pop %v68
  %v71 = vmul.f32 1.0, %v70
  %v72 = vrcp.pop %v69
  %v73 = vmul.f32 1.0, %v72
  %v74 = vld [vmem:[%s52] sm:$0xff]
  %v75 = vld [vmem:[%s52 + $0x8] sm:$0xff]
  %v76 = vmul.f32 %v71, %v74
  %v77 = vmul.f32 %v73, %v75
  %v78 = vadd.f32 %v76, %v77
  %v79 = vrot.slane %v78, 4
  %v80 = vadd.f32 %v78, %v79
  %v81 = vrot.slane %v80, 2
  %v82 = vadd.f32 %v80, %v81
  %v83 = vrot.slane %v82, 1
  %v84 = vadd.f32 %v82, %v83
  %v85 = vadd.f32 %v71, %v74
  %v86 = vadd.f32 %v73, %v75
  %v87 = vadd.f32 %v85, %v86
  %v88 = vrot.slane %v87, 4
  %v89 = vadd.f32 %v87, %v88
  %v90 = vrot.slane %v89, 2
  %v91 = vadd.f32 %v89, %v90
  %v92 = vrot.slane %v91, 1
  %v93 = vadd.f32 %v91, %v92
  %v94 = vld [vmem:[%s2] sm:$0x1]
  %v95 = vadd.f32 %v94, %v84
  %96 = vst [vmem:[%s2] sm:$0x1] %v95
  %v97 = vld [vmem:[%s2 + $0x1] sm:$0x1]
  %v98 = vadd.f32 %v97, %v93
  %99 = vst [vmem:[%s2 + $0x1] sm:$0x1] %v98
  // Predicated region
  $region14: #{dice_loss.1} parent=0 // pred_check
    _
  $region15: #{dice_loss.1} parent=0 // pred_check_branch
    %101 = sbr.rel (0) target = $region17
  $region16: #{dice_loss.1} parent=0 // pred_region
    _
  $region17: #{dice_loss.1} parent=0 // pred_fallthru
    _
  // Predicated region
  $region18: #{dice_loss.1} parent=0 // pred_check
    _
  $region19: #{dice_loss.1} parent=0 // pred_check_branch
    %103 = sbr.rel (0) target = $region21
  $region20: #{dice_loss.1} parent=0 // pred_region
    _
  $region21: #{dice_loss.1} parent=0 // pred_fallthru
    _

</llo_original>
